<compile_context>
chip_gen: v7x
topology: tpu7x:2x2x1
jax: 0.10.0
libtpu: 0.0.40
codegen_flags: <defaults>
</compile_context>

<pallas_src>
import math

import jax
import jax.numpy as jnp
from jax.experimental import pallas as pl
from jax.experimental.pallas import tpu as pltpu


def _att_pool_kernel(bias_ref, w1_ref, w2_ref, q_ref, m1_ref, m2_ref, o_ref):
    # Per-grid-step views (leading graph dim squeezed by the BlockSpecs):
    m1 = m1_ref[...]            # [n_nodes, D]
    m2 = m2_ref[...]            # [n_nodes, D]
    q = q_ref[...]              # [1, D]
    w1 = w1_ref[...]            # [1, D]
    w2 = w2_ref[...]            # [1, D]

    # --- per-node gate logits (Linear(D, 1)) ------------------------------
    g1 = jnp.sum(m1 * w1, axis=-1, keepdims=True) + bias_ref[0]   # [n, 1]
    g2 = jnp.sum(m2 * w2, axis=-1, keepdims=True) + bias_ref[1]   # [n, 1]

    # --- softmax over the nodes of this graph (stable, reciprocal-mul) ----
    e1 = jnp.exp(g1 - jnp.max(g1, axis=0, keepdims=True))
    a1 = e1 * pl.reciprocal(jnp.sum(e1, axis=0, keepdims=True))   # [n, 1]
    e2 = jnp.exp(g2 - jnp.max(g2, axis=0, keepdims=True))
    a2 = e2 * pl.reciprocal(jnp.sum(e2, axis=0, keepdims=True))   # [n, 1]

    # --- graph-level readouts ---------------------------------------------
    r1 = jnp.sum(a1 * m1, axis=0, keepdims=True)                  # [1, D]
    r2 = jnp.sum(a2 * m2, axis=0, keepdims=True)                  # [1, D]

    # --- 2-way attention between the two readouts -------------------------
    s1 = jnp.sum(q * r1, axis=-1, keepdims=True)                  # [1, 1]
    s2 = jnp.sum(q * r2, axis=-1, keepdims=True)                  # [1, 1]
    sm = jnp.maximum(s1, s2)
    es1 = jnp.exp(s1 - sm)
    es2 = jnp.exp(s2 - sm)
    inv = pl.reciprocal(es1 + es2)
    att0 = es1 * inv                                              # [1, 1]
    att1 = es2 * inv                                              # [1, 1]

    # --- mix node features with the graph attention weights ----------------
    o_ref[...] = (m1 * att0 + m2 * att1).astype(o_ref.dtype)


def att_pooling_3d(Q, M1, M2, w1, b1, w2, b2):
    """Q: [B, D]; M1/M2: [B, n_nodes, D]; w1/w2: [D]; b1/b2: scalars."""
    B, n_nodes, D = M1.shape
    assert Q.shape == (B, D) and M2.shape == (B, n_nodes, D)

    q3 = Q.reshape(B, 1, D).astype(jnp.float32)
    w1r = w1.reshape(1, D).astype(jnp.float32)
    w2r = w2.reshape(1, D).astype(jnp.float32)
    bias = jnp.stack([jnp.asarray(b1), jnp.asarray(b2)]).reshape(2).astype(jnp.float32)

    return pl.pallas_call(
        _att_pool_kernel,
        out_shape=jax.ShapeDtypeStruct((B, n_nodes, D), jnp.float32),
        grid_spec=pl.GridSpec(
            grid=(B,),
            in_specs=[
                # gate biases as SMEM scalars (untiled)
                pl.BlockSpec(memory_space=pltpu.MemorySpace.SMEM),
                # gate weights: tiny resident VMEM blocks, same for every step
                pl.BlockSpec((1, D), lambda b: (0, 0)),
                pl.BlockSpec((1, D), lambda b: (0, 0)),
                # per-graph query row
                pl.BlockSpec((None, 1, D), lambda b: (b, 0, 0)),
                # per-graph node-feature slabs (whole graph per grid step)
                pl.BlockSpec((None, n_nodes, D), lambda b: (b, 0, 0)),
                pl.BlockSpec((None, n_nodes, D), lambda b: (b, 0, 0)),
            ],
            out_specs=pl.BlockSpec((None, n_nodes, D), lambda b: (b, 0, 0)),
        ),
        compiler_params=pltpu.CompilerParams(dimension_semantics=("parallel",)),
    )(bias, w1r, w2r, q3, M1.astype(jnp.float32), M2.astype(jnp.float32))


def _reference(Q, M1, M2, w1, b1, w2, b2):
    g1 = jnp.einsum("bnd,d->bn", M1, w1) + b1
    a1 = jax.nn.softmax(g1, axis=-1)[..., None]
    r1 = jnp.sum(a1 * M1, axis=1)
    g2 = jnp.einsum("bnd,d->bn", M2, w2) + b2
    a2 = jax.nn.softmax(g2, axis=-1)[..., None]
    r2 = jnp.sum(a2 * M2, axis=1)
    s1 = jnp.sum(Q * r1, axis=-1, keepdims=True)
    s2 = jnp.sum(Q * r2, axis=-1, keepdims=True)
    att = jax.nn.softmax(jnp.concatenate([s1, s2], axis=-1), axis=-1)
    return M1 * att[:, 0][:, None, None] + M2 * att[:, 1][:, None, None]


if __name__ == "__main__":
    key = jax.random.PRNGKey(0)
    kq, k1, k2, kw1, kb1, kw2, kb2 = jax.random.split(key, 7)

    B, n_nodes, D = 2, 8, 32      # batch of 2 graphs, 8 nodes each, hidden 32
    Q = jax.random.normal(kq, (B, D), dtype=jnp.float32)
    M1 = jax.random.normal(k1, (B, n_nodes, D), dtype=jnp.float32)
    M2 = jax.random.normal(k2, (B, n_nodes, D), dtype=jnp.float32)

    lim = 1.0 / math.sqrt(D)      # nn.Linear default init scale
    w1 = jax.random.uniform(kw1, (D,), jnp.float32, -lim, lim)
    b1 = jax.random.uniform(kb1, (), jnp.float32, -lim, lim)
    w2 = jax.random.uniform(kw2, (D,), jnp.float32, -lim, lim)
    b2 = jax.random.uniform(kb2, (), jnp.float32, -lim, lim)

    out = att_pooling_3d(Q, M1, M2, w1, b1, w2, b2)
    out = jax.block_until_ready(out)
    ref = _reference(Q, M1, M2, w1, b1, w2, b2)

    if jnp.allclose(out, ref, atol=1e-5, rtol=1e-5):
        print("KERNEL_OK")
    else:
        print("mismatch: max abs err", float(jnp.max(jnp.abs(out - ref))))
</pallas_src>

<mosaic_0001>
module attributes {stable_mosaic.version = 11 : i64} {
  func.func @_att_pool_kernel(%arg0: i32, %arg1: memref<2xf32, #tpu.memory_space<smem>>, %arg2: memref<1x32xf32, #tpu.memory_space<vmem>>, %arg3: memref<1x32xf32, #tpu.memory_space<vmem>>, %arg4: memref<1x1x32xf32, #tpu.memory_space<vmem>>, %arg5: memref<1x8x32xf32, #tpu.memory_space<vmem>>, %arg6: memref<1x8x32xf32, #tpu.memory_space<vmem>>, %arg7: memref<1x8x32xf32, #tpu.memory_space<vmem>>) attributes {dimension_semantics = [#tpu.dimension_semantics<parallel>], iteration_bounds = array<i64: 2>, scalar_prefetch = 0 : i64, scratch_operands = 0 : i64, tpu.core_type = #tpu.core_type<tc>, window_params = [{transform_indices = @transform_0, window_bounds = array<i64: 2>}, {pipeline_mode = #tpu.pipeline_mode<synchronous>, transform_indices = @transform_1, window_bounds = array<i64: 1, 32>}, {pipeline_mode = #tpu.pipeline_mode<synchronous>, transform_indices = @transform_2, window_bounds = array<i64: 1, 32>}, {transform_indices = @transform_3, window_bounds = array<i64: 1, 1, 32>}, {transform_indices = @transform_4, window_bounds = array<i64: 1, 8, 32>}, {transform_indices = @transform_5, window_bounds = array<i64: 1, 8, 32>}, {transform_indices = @transform_6, window_bounds = array<i64: 1, 8, 32>}]} {
    %c0 = arith.constant 0 : index
    %c0_0 = arith.constant 0 : index
    %c0_1 = arith.constant 0 : index
    %0 = vector.load %arg5[%c0, %c0_0, %c0_1] : memref<1x8x32xf32, #tpu.memory_space<vmem>>, vector<1x8x32xf32>
    %1 = vector.shape_cast %0 : vector<1x8x32xf32> to vector<8x32xf32>
    %c0_2 = arith.constant 0 : index
    %c0_3 = arith.constant 0 : index
    %c0_4 = arith.constant 0 : index
    %2 = vector.load %arg6[%c0_2, %c0_3, %c0_4] : memref<1x8x32xf32, #tpu.memory_space<vmem>>, vector<1x8x32xf32>
    %3 = vector.shape_cast %2 : vector<1x8x32xf32> to vector<8x32xf32>
    %c0_5 = arith.constant 0 : index
    %c0_6 = arith.constant 0 : index
    %c0_7 = arith.constant 0 : index
    %4 = vector.load %arg4[%c0_5, %c0_6, %c0_7] : memref<1x1x32xf32, #tpu.memory_space<vmem>>, vector<1x1x32xf32>
    %5 = vector.shape_cast %4 : vector<1x1x32xf32> to vector<1x32xf32>
    %c0_8 = arith.constant 0 : index
    %c0_9 = arith.constant 0 : index
    %6 = vector.load %arg2[%c0_8, %c0_9] : memref<1x32xf32, #tpu.memory_space<vmem>>, vector<1x32xf32>
    %c0_10 = arith.constant 0 : index
    %c0_11 = arith.constant 0 : index
    %7 = vector.load %arg3[%c0_10, %c0_11] : memref<1x32xf32, #tpu.memory_space<vmem>>, vector<1x32xf32>
    %8 = vector.broadcast %6 : vector<1x32xf32> to vector<8x32xf32>
    %9 = arith.mulf %1, %8 : vector<8x32xf32>
    %cst = arith.constant dense<0.000000e+00> : vector<8xf32>
    %10 = vector.multi_reduction <add>, %9, %cst [1] : vector<8x32xf32> to vector<8xf32>
    %11 = vector.shape_cast %10 : vector<8xf32> to vector<8x1xf32>
    %c0_12 = arith.constant 0 : index
    %12 = memref.load %arg1[%c0_12] : memref<2xf32, #tpu.memory_space<smem>>
    %13 = vector.broadcast %12 : f32 to vector<8x1xf32>
    %14 = arith.addf %11, %13 : vector<8x1xf32>
    %15 = vector.broadcast %7 : vector<1x32xf32> to vector<8x32xf32>
    %16 = arith.mulf %3, %15 : vector<8x32xf32>
    %cst_13 = arith.constant dense<0.000000e+00> : vector<8xf32>
    %17 = vector.multi_reduction <add>, %16, %cst_13 [1] : vector<8x32xf32> to vector<8xf32>
    %18 = vector.shape_cast %17 : vector<8xf32> to vector<8x1xf32>
    %c1 = arith.constant 1 : index
    %19 = memref.load %arg1[%c1] : memref<2xf32, #tpu.memory_space<smem>>
    %20 = vector.broadcast %19 : f32 to vector<8x1xf32>
    %21 = arith.addf %18, %20 : vector<8x1xf32>
    %cst_14 = arith.constant dense<0xFF800000> : vector<1xf32>
    %22 = vector.multi_reduction <maximumf>, %14, %cst_14 [0] : vector<8x1xf32> to vector<1xf32>
    %23 = vector.shape_cast %22 : vector<1xf32> to vector<1x1xf32>
    %24 = vector.broadcast %23 : vector<1x1xf32> to vector<8x1xf32>
    %25 = arith.subf %14, %24 : vector<8x1xf32>
    %26 = math.exp %25 : vector<8x1xf32>
    %cst_15 = arith.constant dense<0.000000e+00> : vector<1xf32>
    %27 = vector.multi_reduction <add>, %26, %cst_15 [0] : vector<8x1xf32> to vector<1xf32>
    %28 = vector.shape_cast %27 : vector<1xf32> to vector<1x1xf32>
    %29 = tpu.reciprocal %28 : vector<1x1xf32> -> vector<1x1xf32>
    %30 = vector.broadcast %29 : vector<1x1xf32> to vector<8x1xf32>
    %31 = arith.mulf %26, %30 : vector<8x1xf32>
    %cst_16 = arith.constant dense<0xFF800000> : vector<1xf32>
    %32 = vector.multi_reduction <maximumf>, %21, %cst_16 [0] : vector<8x1xf32> to vector<1xf32>
    %33 = vector.shape_cast %32 : vector<1xf32> to vector<1x1xf32>
    %34 = vector.broadcast %33 : vector<1x1xf32> to vector<8x1xf32>
    %35 = arith.subf %21, %34 : vector<8x1xf32>
    %36 = math.exp %35 : vector<8x1xf32>
    %cst_17 = arith.constant dense<0.000000e+00> : vector<1xf32>
    %37 = vector.multi_reduction <add>, %36, %cst_17 [0] : vector<8x1xf32> to vector<1xf32>
    %38 = vector.shape_cast %37 : vector<1xf32> to vector<1x1xf32>
    %39 = tpu.reciprocal %38 : vector<1x1xf32> -> vector<1x1xf32>
    %40 = vector.broadcast %39 : vector<1x1xf32> to vector<8x1xf32>
    %41 = arith.mulf %36, %40 : vector<8x1xf32>
    %42 = vector.broadcast %31 : vector<8x1xf32> to vector<8x32xf32>
    %43 = arith.mulf %42, %1 : vector<8x32xf32>
    %cst_18 = arith.constant dense<0.000000e+00> : vector<32xf32>
    %44 = vector.multi_reduction <add>, %43, %cst_18 [0] : vector<8x32xf32> to vector<32xf32>
    %45 = vector.shape_cast %44 : vector<32xf32> to vector<1x32xf32>
    %46 = vector.broadcast %41 : vector<8x1xf32> to vector<8x32xf32>
    %47 = arith.mulf %46, %3 : vector<8x32xf32>
    %cst_19 = arith.constant dense<0.000000e+00> : vector<32xf32>
    %48 = vector.multi_reduction <add>, %47, %cst_19 [0] : vector<8x32xf32> to vector<32xf32>
    %49 = vector.shape_cast %48 : vector<32xf32> to vector<1x32xf32>
    %50 = arith.mulf %5, %45 : vector<1x32xf32>
    %cst_20 = arith.constant dense<0.000000e+00> : vector<1xf32>
    %51 = vector.multi_reduction <add>, %50, %cst_20 [1] : vector<1x32xf32> to vector<1xf32>
    %52 = vector.shape_cast %51 : vector<1xf32> to vector<1x1xf32>
    %53 = arith.mulf %5, %49 : vector<1x32xf32>
    %cst_21 = arith.constant dense<0.000000e+00> : vector<1xf32>
    %54 = vector.multi_reduction <add>, %53, %cst_21 [1] : vector<1x32xf32> to vector<1xf32>
    %55 = vector.shape_cast %54 : vector<1xf32> to vector<1x1xf32>
    %56 = arith.maximumf %52, %55 : vector<1x1xf32>
    %57 = arith.subf %52, %56 : vector<1x1xf32>
    %58 = math.exp %57 : vector<1x1xf32>
    %59 = arith.subf %55, %56 : vector<1x1xf32>
    %60 = math.exp %59 : vector<1x1xf32>
    %61 = arith.addf %58, %60 : vector<1x1xf32>
    %62 = tpu.reciprocal %61 : vector<1x1xf32> -> vector<1x1xf32>
    %63 = arith.mulf %58, %62 : vector<1x1xf32>
    %64 = arith.mulf %60, %62 : vector<1x1xf32>
    %65 = vector.broadcast %63 : vector<1x1xf32> to vector<8x32xf32>
    %66 = arith.mulf %1, %65 : vector<8x32xf32>
    %67 = vector.broadcast %64 : vector<1x1xf32> to vector<8x32xf32>
    %68 = arith.mulf %3, %67 : vector<8x32xf32>
    %69 = arith.addf %66, %68 : vector<8x32xf32>
    %c0_22 = arith.constant 0 : index
    %c0_23 = arith.constant 0 : index
    %c0_24 = arith.constant 0 : index
    %70 = vector.load %arg7[%c0_22, %c0_23, %c0_24] : memref<1x8x32xf32, #tpu.memory_space<vmem>>, vector<1x8x32xf32>
    %71 = vector.shape_cast %70 : vector<1x8x32xf32> to vector<8x32xf32>
    %72 = vector.shape_cast %69 : vector<8x32xf32> to vector<1x8x32xf32>
    tpu.vector_store %arg7[%c0_22, %c0_23, %c0_24], %72 {strides = array<i32>} : memref<1x8x32xf32, #tpu.memory_space<vmem>>, vector<1x8x32xf32>,
    return
  }
  func.func @transform_0(%arg0: i32) -> i32 {
    %c0_i32 = arith.constant 0 : i32
    %c0_i32_0 = arith.constant 0 : i32
    return %c0_i32 : i32
  }
  func.func @transform_1(%arg0: i32) -> (i32, i32) {
    %c0_i32 = arith.constant 0 : i32
    %c0_i32_0 = arith.constant 0 : i32
    %c0_i32_1 = arith.constant 0 : i32
    return %c0_i32, %c0_i32_0 : i32, i32
  }
  func.func @transform_2(%arg0: i32) -> (i32, i32) {
    %c0_i32 = arith.constant 0 : i32
    %c0_i32_0 = arith.constant 0 : i32
    %c0_i32_1 = arith.constant 0 : i32
    return %c0_i32, %c0_i32_0 : i32, i32
  }
  func.func @transform_3(%arg0: i32) -> (i32, i32, i32) {
    %c0_i32 = arith.constant 0 : i32
    %c0_i32_0 = arith.constant 0 : i32
    %c0_i32_1 = arith.constant 0 : i32
    return %arg0, %c0_i32, %c0_i32_0 : i32, i32, i32
  }
  func.func @transform_4(%arg0: i32) -> (i32, i32, i32) {
    %c0_i32 = arith.constant 0 : i32
    %c0_i32_0 = arith.constant 0 : i32
    %c0_i32_1 = arith.constant 0 : i32
    return %arg0, %c0_i32, %c0_i32_0 : i32, i32, i32
  }
  func.func @transform_5(%arg0: i32) -> (i32, i32, i32) {
    %c0_i32 = arith.constant 0 : i32
    %c0_i32_0 = arith.constant 0 : i32
    %c0_i32_1 = arith.constant 0 : i32
    return %arg0, %c0_i32, %c0_i32_0 : i32, i32, i32
  }
  func.func @transform_6(%arg0: i32) -> (i32, i32, i32) {
    %c0_i32 = arith.constant 0 : i32
    %c0_i32_0 = arith.constant 0 : i32
    %c0_i32_1 = arith.constant 0 : i32
    return %arg0, %c0_i32, %c0_i32_0 : i32, i32, i32
  }
}

</mosaic_0001>

<llo_original>
// kernel: tpu_custom_call.1
$region0: #{tpu_custom_call.1}
  #allocation0 [shape = 'u32[]', space=smem, size = 0x4, offset = 0x4, fixed_abs, tag = 'smem constant byte address 0x4 - core index']
  #allocation1 [shape = 'u32[144,128]{1,0:T(1,128)}', space=vmem, size = 0x12000, scoped, tag = 'internal scratch']
  %s0 = inlined_call_operand.hbm [shape: f32[2], index: 0, kind: input, shape index: {}]
  %s1 = inlined_call_operand.hbm [shape: f32[1,32], index: 1, kind: input, shape index: {}]
  %s2 = inlined_call_operand.hbm [shape: f32[1,32], index: 2, kind: input, shape index: {}]
  %s3 = inlined_call_operand.vmem [shape: f32[2,1,32], index: 3, kind: input, shape index: {}]
  %s4 = inlined_call_operand.hbm [shape: f32[2,8,32], index: 4, kind: input, shape index: {}]
  %s5 = inlined_call_operand.vmem [shape: f32[2,8,32], index: 5, kind: input, shape index: {}]
  %s6 = inlined_call_operand.hbm [shape: f32[2,8,32], index: 6, kind: output, shape index: {}]
  %s7 = sld [smem:[#allocation0]]
  $region73: #{tpu_custom_call.1} parent=0
    _
  %s9 = ssub.s32 1, %s7
  %s10 = scalar_select 0, %s9, %s7
  $region1: #{tpu_custom_call.1} parent=0
    #allocation2 [shape = 'u8[512]{0}', space=smem, size = 0x200, scoped, tag = 'input window, operand 0, single buffered']
    #allocation3 [shape = 's32[2]{0}', space=sflag, size = 0x8, scoped, tag = 'scoped memory for tpu_custom_call.1']
    #allocation4 [shape = 's32[2]{0}', space=sflag, size = 0x8, scoped, tag = 'scoped memory for tpu_custom_call.1']
    #allocation5 [shape = 's32[2]{0}', space=sflag, size = 0x8, scoped, tag = 'scoped memory for tpu_custom_call.1']
    #allocation6 [shape = 'u8[512]{0}', space=vmem, size = 0x400, scoped, tag = 'input window, operand 1, single buffered']
    #allocation7 [shape = 'u8[512]{0}', space=vmem, size = 0x400, scoped, tag = 'input window, operand 2, single buffered']
    #allocation8 [shape = 's32[1]{0}', space=sflag, size = 0x4, scoped, tag = 'scoped memory for tpu_custom_call.1']
    #allocation9 [shape = 'u8[8192]{0}', space=vmem, size = 0x2000, scoped, tag = 'input window, operand 4']
    #allocation10 [shape = 'u8[8192]{0}', space=vmem, size = 0x2000, scoped, tag = 'output window, operand 0']
    %11 = vsyncpa [#allocation5], 0
    %12 = vsyncpa [#allocation3], 0
    %13 = vsyncpa [#allocation8], 0
    %14 = vsyncpa [#allocation4], 0
    %s15 = scalar_lea.sflag [#allocation4], 1
    %16 = vsyncpa %s15, 0
    loop: start=0, step=1, limit=4
    $region2: #{tpu_custom_call.1} parent=1 // loop_pre_header
      _
    $region3: #{tpu_custom_call.1} parent=1 // loop_header
      %s18 = sphi 0, %s22
      %p19 = scmp.ge.s32.totalorder %s18, 4
      %s26 = sphi 0, %s26
      %s28 = sphi 0, %s26
      %s29 = sphi 0, %s28
      %s43 = sphi 0, %s29
      %s47 = sphi 0, %s47
      %s49 = sphi 0, %s47
      %s50 = sphi 0, %s49
      %s64 = sphi 0, %s50
      %s68 = sphi 0, %s68
      %s70 = sphi 0, %s68
      %s71 = sphi 0, %s70
      %s85 = sphi 0, %s71
      %s91 = sphi 0, %s93
      %s94 = sphi 0, %s91
      %s95 = sphi 0, %s94
      %s111 = sphi 0, %s95
      %s117 = sphi 0, %s119
      %s120 = sphi 0, %s117
      %s121 = sphi 0, %s120
      %s137 = sphi 0, %s121
      %s143 = sphi 0, %s145
      %s146 = sphi 0, %s143
      %s147 = sphi 0, %s146
      %s163 = sphi 0, %s147
      %s169 = sphi 0, %s171
      %s172 = sphi 0, %s169
      %s173 = sphi 0, %s172
      %s189 = sphi 0, %s173
    $region4: #{tpu_custom_call.1} parent=1 // loop_header_branch
      %21 = sbr.rel (%p19) target = $region8
    $region5: #{tpu_custom_call.1} parent=1 // loop_body
      %s23 = ssub.s32 %s18, 1
      %s24 = ssub.s32 %s18, 2
      %s25 = sadd.s32 %s18, 1
      %s27 = sadd.s32 %s26, 1
      %p30 = scmp.eq.s32.totalorder %s18, 1
      %p31 = scmp.ne.s32.totalorder %s26, %s28
      %p32 = scmp.eq.s32.totalorder %s18, 0
      %p33 = por %p31, %p32
      %p34 = scmp.ne.s32.totalorder %s26, %s28
      %p35 = scmp.eq.s32.totalorder %s23, 1
      %p36 = por %p34, %p35
      %p37 = scmp.ne.s32.totalorder %s28, %s29
      %p38 = scmp.eq.s32.totalorder %s23, 0
      %p39 = por %p37, %p38
      %p40 = scmp.ne.s32.totalorder %s28, %s29
      %p41 = scmp.eq.s32.totalorder %s24, 1
      %p42 = por %p40, %p41
      %p44 = scmp.ne.s32.totalorder %s29, %s43
      %p45 = scmp.eq.s32.totalorder %s24, 0
      %p46 = por %p44, %p45
      %s48 = sadd.s32 %s47, 1
      %p51 = scmp.eq.s32.totalorder %s18, 1
      %p52 = scmp.ne.s32.totalorder %s47, %s49
      %p53 = scmp.eq.s32.totalorder %s18, 0
      %p54 = por %p52, %p53
      %p55 = scmp.ne.s32.totalorder %s47, %s49
      %p56 = scmp.eq.s32.totalorder %s23, 1
      %p57 = por %p55, %p56
      %p58 = scmp.ne.s32.totalorder %s49, %s50
      %p59 = scmp.eq.s32.totalorder %s23, 0
      %p60 = por %p58, %p59
      %p61 = scmp.ne.s32.totalorder %s49, %s50
      %p62 = scmp.eq.s32.totalorder %s24, 1
      %p63 = por %p61, %p62
      %p65 = scmp.ne.s32.totalorder %s50, %s64
      %p66 = scmp.eq.s32.totalorder %s24, 0
      %p67 = por %p65, %p66
      %s69 = sadd.s32 %s68, 1
      %p72 = scmp.eq.s32.totalorder %s18, 1
      %p73 = scmp.ne.s32.totalorder %s68, %s70
      %p74 = scmp.eq.s32.totalorder %s18, 0
      %p75 = por %p73, %p74
      %p76 = scmp.ne.s32.totalorder %s68, %s70
      %p77 = scmp.eq.s32.totalorder %s23, 1
      %p78 = por %p76, %p77
      %p79 = scmp.ne.s32.totalorder %s70, %s71
      %p80 = scmp.eq.s32.totalorder %s23, 0
      %p81 = por %p79, %p80
      %p82 = scmp.ne.s32.totalorder %s70, %s71
      %p83 = scmp.eq.s32.totalorder %s24, 1
      %p84 = por %p82, %p83
      %p86 = scmp.ne.s32.totalorder %s71, %s85
      %p87 = scmp.eq.s32.totalorder %s24, 0
      %p88 = por %p86, %p87
      %s89 = ssub.s32 %s18, %s25
      %p90 = scmp.eq.s32.totalorder %s89, 0
      %s92 = sadd.s32 %s91, 1
      %s93 = scalar_select %p90, %s91, %s92
      %p96 = pneg %p90
      %p97 = scmp.eq.s32.totalorder %s18, 1
      %p98 = por %p96, %p97
      %p99 = scmp.ne.s32.totalorder %s91, %s94
      %p100 = scmp.eq.s32.totalorder %s18, 0
      %p101 = por %p99, %p100
      %p102 = scmp.ne.s32.totalorder %s91, %s94
      %p103 = scmp.eq.s32.totalorder %s23, 1
      %p104 = por %p102, %p103
      %p105 = scmp.ne.s32.totalorder %s94, %s95
      %p106 = scmp.eq.s32.totalorder %s23, 0
      %p107 = por %p105, %p106
      %p108 = scmp.ne.s32.totalorder %s94, %s95
      %p109 = scmp.eq.s32.totalorder %s24, 1
      %p110 = por %p108, %p109
      %p112 = scmp.ne.s32.totalorder %s95, %s111
      %p113 = scmp.eq.s32.totalorder %s24, 0
      %p114 = por %p112, %p113
      %s115 = ssub.s32 %s18, %s25
      %p116 = scmp.eq.s32.totalorder %s115, 0
      %s118 = sadd.s32 %s117, 1
      %s119 = scalar_select %p116, %s117, %s118
      %p122 = pneg %p116
      %p123 = scmp.eq.s32.totalorder %s18, 1
      %p124 = por %p122, %p123
      %p125 = scmp.ne.s32.totalorder %s117, %s120
      %p126 = scmp.eq.s32.totalorder %s18, 0
      %p127 = por %p125, %p126
      %p128 = scmp.ne.s32.totalorder %s117, %s120
      %p129 = scmp.eq.s32.totalorder %s23, 1
      %p130 = por %p128, %p129
      %p131 = scmp.ne.s32.totalorder %s120, %s121
      %p132 = scmp.eq.s32.totalorder %s23, 0
      %p133 = por %p131, %p132
      %p134 = scmp.ne.s32.totalorder %s120, %s121
      %p135 = scmp.eq.s32.totalorder %s24, 1
      %p136 = por %p134, %p135
      %p138 = scmp.ne.s32.totalorder %s121, %s137
      %p139 = scmp.eq.s32.totalorder %s24, 0
      %p140 = por %p138, %p139
      %s141 = ssub.s32 %s18, %s25
      %p142 = scmp.eq.s32.totalorder %s141, 0
      %s144 = sadd.s32 %s143, 1
      %s145 = scalar_select %p142, %s143, %s144
      %p148 = pneg %p142
      %p149 = scmp.eq.s32.totalorder %s18, 1
      %p150 = por %p148, %p149
      %p151 = scmp.ne.s32.totalorder %s143, %s146
      %p152 = scmp.eq.s32.totalorder %s18, 0
      %p153 = por %p151, %p152
      %p154 = scmp.ne.s32.totalorder %s143, %s146
      %p155 = scmp.eq.s32.totalorder %s23, 1
      %p156 = por %p154, %p155
      %p157 = scmp.ne.s32.totalorder %s146, %s147
      %p158 = scmp.eq.s32.totalorder %s23, 0
      %p159 = por %p157, %p158
      %p160 = scmp.ne.s32.totalorder %s146, %s147
      %p161 = scmp.eq.s32.totalorder %s24, 1
      %p162 = por %p160, %p161
      %p164 = scmp.ne.s32.totalorder %s147, %s163
      %p165 = scmp.eq.s32.totalorder %s24, 0
      %p166 = por %p164, %p165
      %s167 = ssub.s32 %s18, %s25
      %p168 = scmp.eq.s32.totalorder %s167, 0
      %s170 = sadd.s32 %s169, 1
      %s171 = scalar_select %p168, %s169, %s170
      %p174 = pneg %p168
      %p175 = scmp.eq.s32.totalorder %s18, 1
      %p176 = por %p174, %p175
      %p177 = scmp.ne.s32.totalorder %s169, %s172
      %p178 = scmp.eq.s32.totalorder %s18, 0
      %p179 = por %p177, %p178
      %p180 = scmp.ne.s32.totalorder %s169, %s172
      %p181 = scmp.eq.s32.totalorder %s23, 1
      %p182 = por %p180, %p181
      %p183 = scmp.ne.s32.totalorder %s172, %s173
      %p184 = scmp.eq.s32.totalorder %s23, 0
      %p185 = por %p183, %p184
      %p186 = scmp.ne.s32.totalorder %s172, %s173
      %p187 = scmp.eq.s32.totalorder %s24, 1
      %p188 = por %p186, %p187
      %p190 = scmp.ne.s32.totalorder %s173, %s189
      %p191 = scmp.eq.s32.totalorder %s24, 0
      %p192 = por %p190, %p191
      %p193 = scmp.le.s32.totalorder 1, %s18
      %p194 = scmp.lt.s32.totalorder %s18, 3
      %p195 = pnand %p193, %p194
      %p196 = pneg %p195
      // Predicated region
      $region9: #{tpu_custom_call.1} parent=5 // pred_check
        _
      $region10: #{tpu_custom_call.1} parent=5 // pred_check_branch
        %198 = sbr.rel (%p195) target = $region12
      $region11: #{tpu_custom_call.1} parent=5 // pred_region
        %s199 = ssub.s32 %s18, 1
        // Predicated region
        $region13: #{tpu_custom_call.1} parent=11 // pred_check
          %p200 = pneg %p39
        $region14: #{tpu_custom_call.1} parent=11 // pred_check_branch
          %202 = sbr.rel (%p200) target = $region16
        $region15: #{tpu_custom_call.1} parent=11 // pred_region
          %s204 = ssub.s32 16, 16
          %205 = vsyncadd [#allocation5], %s204
          %208 = dma.hbm_to_smem %s0, 16, [#allocation2], [#allocation5]
        $region16: #{tpu_custom_call.1} parent=11 // pred_fallthru
          _
        // Predicated region
        $region17: #{tpu_custom_call.1} parent=11 // pred_check
          %p209 = pneg %p60
        $region18: #{tpu_custom_call.1} parent=11 // pred_check_branch
          %211 = sbr.rel (%p209) target = $region20
        $region19: #{tpu_custom_call.1} parent=11 // pred_region
          %s213 = ssub.s32 16, 16
          %214 = vsyncadd [#allocation3], %s213
          %s216 = sshll.u32 [#allocation6], 4
          %s217 = int_to_ptr.vmem [resolvable:$true] %s216
          %219 = dma.hbm_to_vmem [thread:$0]  %s1, 16, %s217, [#allocation3]
        $region20: #{tpu_custom_call.1} parent=11 // pred_fallthru
          _
        // Predicated region
        $region21: #{tpu_custom_call.1} parent=11 // pred_check
          %p220 = pneg %p81
        $region22: #{tpu_custom_call.1} parent=11 // pred_check_branch
          %222 = sbr.rel (%p220) target = $region24
        $region23: #{tpu_custom_call.1} parent=11 // pred_region
          %s224 = ssub.s32 16, 16
          %225 = vsyncadd [#allocation8], %s224
          %s227 = sshll.u32 [#allocation7], 4
          %s228 = int_to_ptr.vmem [resolvable:$true] %s227
          %230 = dma.hbm_to_vmem [thread:$0]  %s2, 16, %s228, [#allocation8]
        $region24: #{tpu_custom_call.1} parent=11 // pred_fallthru
          _
      $region12: #{tpu_custom_call.1} parent=5 // pred_fallthru
        _
      %p231 = scmp.lt.s32.totalorder %s18, 2
      // Predicated region
      $region25: #{tpu_custom_call.1} parent=5 // pred_check
        %p232 = pneg %p231
      $region26: #{tpu_custom_call.1} parent=5 // pred_check_branch
        %234 = sbr.rel (%p232) target = $region28
      $region27: #{tpu_custom_call.1} parent=5 // pred_region
        // Predicated region
        $region29: #{tpu_custom_call.1} parent=27 // pred_check
          %p235 = pneg %p101
        $region30: #{tpu_custom_call.1} parent=27 // pred_check_branch
          %237 = sbr.rel (%p235) target = $region32
        $region31: #{tpu_custom_call.1} parent=27 // pred_region
          %p238 = scmp.lt.s32.totalorder %s18, 1
          %s239 = scalar_select %p238, %s18, 1
          %s240 = scalar_lea.vmem %s3, %s239
        $region32: #{tpu_custom_call.1} parent=27 // pred_fallthru
          _
        // Predicated region
        $region33: #{tpu_custom_call.1} parent=27 // pred_check
          %p241 = pneg %p127
        $region34: #{tpu_custom_call.1} parent=27 // pred_check_branch
          %243 = sbr.rel (%p241) target = $region36
        $region35: #{tpu_custom_call.1} parent=27 // pred_region
          %s244 = sand.u32 %s18, 1
          %s245 = scalar_lea.sflag [#allocation3], %s244
          %s246 = sand.u32 %s117, 1
          %s247 = smul.addr %s246, 8
          %s248 = scalar_lea.vmem [#allocation9], %s247
          %s250 = ssub.s32 128, 128
          %251 = vsyncadd %s245, %s250
          %s252 = smul.addr %s18, 128
          %s253 = scalar_lea.hbm %s4, %s252
          %s255 = sshll.u32 %s248, 4
          %s256 = int_to_ptr.vmem [resolvable:$true] %s255
          %258 = dma.hbm_to_vmem [thread:$0]  %s253, 128, %s256, %s245
        $region36: #{tpu_custom_call.1} parent=27 // pred_fallthru
          _
        // Predicated region
        $region37: #{tpu_custom_call.1} parent=27 // pred_check
          %p259 = pneg %p153
        $region38: #{tpu_custom_call.1} parent=27 // pred_check_branch
          %261 = sbr.rel (%p259) target = $region40
        $region39: #{tpu_custom_call.1} parent=27 // pred_region
          %p262 = scmp.lt.s32.totalorder %s18, 1
          %s263 = scalar_select %p262, %s18, 1
          %s264 = smul.addr %s263, 8
          %s265 = scalar_lea.vmem %s5, %s264
        $region40: #{tpu_custom_call.1} parent=27 // pred_fallthru
          _
      $region28: #{tpu_custom_call.1} parent=5 // pred_fallthru
        _
      %p266 = scmp.le.s32.totalorder 1, %s18
      %p267 = scmp.lt.s32.totalorder %s18, 3
      %p268 = pnand %p266, %p267
      %p269 = pneg %p268
      // Predicated region
      $region41: #{tpu_custom_call.1} parent=5 // pred_check
        _
      $region42: #{tpu_custom_call.1} parent=5 // pred_check_branch
        %271 = sbr.rel (%p268) target = $region44
      $region43: #{tpu_custom_call.1} parent=5 // pred_region
        %s272 = ssub.s32 %s18, 1
        // Predicated region
        $region45: #{tpu_custom_call.1} parent=43 // pred_check
          %p273 = pneg %p39
        $region46: #{tpu_custom_call.1} parent=43 // pred_check_branch
          %275 = sbr.rel (%p273) target = $region48
        $region47: #{tpu_custom_call.1} parent=43 // pred_region
          %276 = dma.done [#allocation5], 16
        $region48: #{tpu_custom_call.1} parent=43 // pred_fallthru
          _
        // Predicated region
        $region49: #{tpu_custom_call.1} parent=43 // pred_check
          %p277 = pneg %p60
        $region50: #{tpu_custom_call.1} parent=43 // pred_check_branch
          %279 = sbr.rel (%p277) target = $region52
        $region51: #{tpu_custom_call.1} parent=43 // pred_region
          %280 = dma.done [#allocation3], 16
        $region52: #{tpu_custom_call.1} parent=43 // pred_fallthru
          _
        // Predicated region
        $region53: #{tpu_custom_call.1} parent=43 // pred_check
          %p281 = pneg %p81
        $region54: #{tpu_custom_call.1} parent=43 // pred_check_branch
          %283 = sbr.rel (%p281) target = $region56
        $region55: #{tpu_custom_call.1} parent=43 // pred_region
          %284 = dma.done [#allocation8], 16
        $region56: #{tpu_custom_call.1} parent=43 // pred_fallthru
          _
        %s285 = sand.u32 %s23, 1
        %s286 = scalar_lea.sflag [#allocation3], %s285
        %s287 = sand.u32 %s120, 1
        %s288 = smul.addr %s287, 8
        %s289 = scalar_lea.vmem [#allocation9], %s288
        // Predicated region
        $region57: #{tpu_custom_call.1} parent=43 // pred_check
          %p290 = pneg %p133
        $region58: #{tpu_custom_call.1} parent=43 // pred_check_branch
          %292 = sbr.rel (%p290) target = $region60
        $region59: #{tpu_custom_call.1} parent=43 // pred_region
          %293 = dma.done %s286, 128
        $region60: #{tpu_custom_call.1} parent=43 // pred_fallthru
          _
        %294 = sfence
        %p295 = pneg %p39
        %p296 = pneg %p36
        %p297 = pneg %p60
        %p298 = pneg %p57
        %p299 = pneg %p81
        %p300 = pneg %p78
        %p301 = scmp.lt.s32.totalorder %s23, 1
        %s302 = scalar_select %p301, %s23, 1
        %s303 = scalar_lea.vmem %s3, %s302
        %p304 = pneg %p107
        %p305 = pneg %p104
        %s306 = sand.u32 %s23, 1
        %s307 = scalar_lea.sflag [#allocation3], %s306
        %s308 = sand.u32 %s120, 1
        %s309 = smul.addr %s308, 8
        %s310 = scalar_lea.vmem [#allocation9], %s309
        %p311 = pneg %p133
        %p312 = pneg %p130
        %p313 = scmp.lt.s32.totalorder %s23, 1
        %s314 = scalar_select %p313, %s23, 1
        %s315 = smul.addr %s314, 8
        %s316 = scalar_lea.vmem %s5, %s315
        %p317 = pneg %p159
        %p318 = pneg %p156
        %p319 = pneg %p185
        %p320 = pneg %p182
        %s321 = sand.u32 %s172, 1
        %s322 = scalar_lea.sflag [#allocation4], %s321
        %s323 = sand.u32 %s172, 1
        %s324 = smul.addr %s323, 8
        %s325 = scalar_lea.vmem [#allocation10], %s324
        %p326 = scmp.lt.s32.totalorder %s23, 1
        %s327 = scalar_select %p326, %s23, 1
        %s328 = scalar_lea.vmem %s3, %s327
        %p329 = scmp.lt.s32.totalorder %s23, 1
        %s330 = scalar_select %p329, %s23, 1
        %s331 = smul.addr %s330, 8
        %s332 = scalar_lea.vmem %s5, %s331
        %v333 = vld [vmem:[%s289] sm:$0xff]
        %v334 = vld [vmem:[%s332] sm:$0xff]
        %v335 = vld [vmem:[%s328] sm:$0x1]
        %v336 = vld [vmem:[#allocation6] sm:$0x1]
        %v337 = vld [vmem:[#allocation7] sm:$0x1]
        %v339 = vlaneseq
        %v340 = vshrl.u32 %v339, 7
        %v341 = vsub.s32 0, %v340
        %v342 = vrot.slane %v336, %v341
        %v344 = vmul.f32 %v333, %v342
        %vm345 = vcmask 261120
        %v346 = vsel %vm345, %v344, 0.0
        %347 = vadd.xlane.f32.xlu0 %v346
        %v348 = vpop.xlane.xlu0 %347
        %s349 = sld [smem:[#allocation2]]
        %v350 = vstv %s349
        %v351 = vadd.f32 %v348, %v350
        %v353 = vlaneseq
        %v354 = vshrl.u32 %v353, 7
        %v355 = vsub.s32 0, %v354
        %v356 = vrot.slane %v337, %v355
        %v358 = vmul.f32 %v334, %v356
        %v359 = vsel %vm345, %v358, 0.0
        %360 = vadd.xlane.f32.xlu0 %v359
        %v361 = vpop.xlane.xlu0 %360
        %s362 = sld [smem:[#allocation2 + $0x1]]
        %v363 = vstv %s362
        %v364 = vadd.f32 %v361, %v363
        %v365 = vrot.slane %v351, 4
        %v366 = vmax.f32 %v351, %v365
        %v367 = vrot.slane %v366, 2
        %v368 = vmax.f32 %v366, %v367
        %v369 = vrot.slane %v368, 1
        %v370 = vmax.f32 %v368, %v369
        %v371 = vsub.f32 %v351, %v370
        %v372 = vmul.f32 %v371, 1.442695
        %v373 = vpow.pop %v372
        %v374 = vrot.slane %v373, 4
        %v375 = vadd.f32 %v373, %v374
        %v376 = vrot.slane %v375, 2
        %v377 = vadd.f32 %v375, %v376
        %v378 = vrot.slane %v377, 1
        %v379 = vadd.f32 %v377, %v378
        %v380 = vrcp.pop %v379
        %v381 = vmul.f32 %v373, %v380
        %v382 = vrot.slane %v364, 4
        %v383 = vmax.f32 %v364, %v382
        %v384 = vrot.slane %v383, 2
        %v385 = vmax.f32 %v383, %v384
        %v386 = vrot.slane %v385, 1
        %v387 = vmax.f32 %v385, %v386
        %v388 = vsub.f32 %v364, %v387
        %v389 = vmul.f32 %v388, 1.442695
        %v390 = vpow.pop %v389
        %v391 = vrot.slane %v390, 4
        %v392 = vadd.f32 %v390, %v391
        %v393 = vrot.slane %v392, 2
        %v394 = vadd.f32 %v392, %v393
        %v395 = vrot.slane %v394, 1
        %v396 = vadd.f32 %v394, %v395
        %v397 = vrcp.pop %v396
        %v398 = vmul.f32 %v390, %v397
        %v399 = vmul.f32 %v381, %v333
        %v400 = vsel %vm345, %v399, 0.0
        %v401 = vrot.slane %v400, 4
        %v402 = vadd.f32 %v400, %v401
        %v403 = vrot.slane %v402, 2
        %v404 = vadd.f32 %v402, %v403
        %v405 = vrot.slane %v404, 1
        %v406 = vadd.f32 %v404, %v405
        %v407 = vmul.f32 %v398, %v334
        %v408 = vsel %vm345, %v407, 0.0
        %v409 = vrot.slane %v408, 4
        %v410 = vadd.f32 %v408, %v409
        %v411 = vrot.slane %v410, 2
        %v412 = vadd.f32 %v410, %v411
        %v413 = vrot.slane %v412, 1
        %v414 = vadd.f32 %v412, %v413
        %v415 = vmul.f32 %v335, %v406
        %vm416 = vcmask 253952
        %v417 = vsel %vm416, %v415, 0.0
        %418 = vadd.xlane.f32.xlu0 %v417
        %v419 = vpop.xlane.xlu0 %418
        %v420 = vmul.f32 %v335, %v414
        %v421 = vsel %vm416, %v420, 0.0
        %422 = vadd.xlane.f32.xlu0 %v421
        %v423 = vpop.xlane.xlu0 %422
        %v424 = vmax.f32 %v419, %v423
        %v425 = vsub.f32 %v419, %v424
        %v426 = vmul.f32 %v425, 1.442695
        %v427 = vpow.pop %v426
        %v428 = vsub.f32 %v423, %v424
        %v429 = vmul.f32 %v428, 1.442695
        %v430 = vpow.pop %v429
        %v431 = vadd.f32 %v427, %v430
        %v432 = vrcp.pop %v431
        %v433 = vmul.f32 %v427, %v432
        %v434 = vmul.f32 %v430, %v432
        %v435 = vlaneseq
        %v436 = vshrl.u32 %v435, 7
        %v437 = vsub.s32 0, %v436
        %v438 = vrot.slane %v433, %v437
        %v439 = vmul.f32 %v333, %v438
        %v440 = vlaneseq
        %v441 = vshrl.u32 %v440, 7
        %v442 = vsub.s32 0, %v441
        %v443 = vrot.slane %v434, %v442
        %v444 = vmul.f32 %v334, %v443
        %v445 = vadd.f32 %v439, %v444
        %446 = vst.msk [vmem:[%s325] sm:$0xff] %vm345, %v445
        %s447 = sand.u32 %s172, 1
        %s448 = scalar_lea.sflag [#allocation4], %s447
        %s449 = sand.u32 %s172, 1
        %s450 = smul.addr %s449, 8
        %s451 = scalar_lea.vmem [#allocation10], %s450
        // Predicated region
        $region61: #{tpu_custom_call.1} parent=43 // pred_check
          %p452 = pneg %p182
        $region62: #{tpu_custom_call.1} parent=43 // pred_check_branch
          %454 = sbr.rel (%p452) target = $region64
        $region63: #{tpu_custom_call.1} parent=43 // pred_region
          %s456 = ssub.s32 128, 128
          %457 = vsyncadd %s448, %s456
          %s458 = smul.addr %s23, 128
          %s459 = scalar_lea.hbm %s6, %s458
          %s461 = sshll.u32 %s451, 4
          %s462 = int_to_ptr.vmem [resolvable:$true] %s461
          %464 = dma.vmem_to_hbm [thread:$0]  %s462, 128, %s459, %s448
        $region64: #{tpu_custom_call.1} parent=43 // pred_fallthru
          _
      $region44: #{tpu_custom_call.1} parent=5 // pred_fallthru
        _
      %p465 = scmp.le.s32.totalorder 2, %s18
      // Predicated region
      $region65: #{tpu_custom_call.1} parent=5 // pred_check
        %p466 = pneg %p465
      $region66: #{tpu_custom_call.1} parent=5 // pred_check_branch
        %468 = sbr.rel (%p466) target = $region68
      $region67: #{tpu_custom_call.1} parent=5 // pred_region
        %s469 = ssub.s32 %s18, 2
        // Predicated region
        $region69: #{tpu_custom_call.1} parent=67 // pred_check
          %p470 = pneg %p188
        $region70: #{tpu_custom_call.1} parent=67 // pred_check_branch
          %472 = sbr.rel (%p470) target = $region72
        $region71: #{tpu_custom_call.1} parent=67 // pred_region
          %s473 = sand.u32 %s173, 1
          %s474 = scalar_lea.sflag [#allocation4], %s473
          %s475 = sand.u32 %s173, 1
          %s476 = smul.addr %s475, 8
          %s477 = scalar_lea.vmem [#allocation10], %s476
          %478 = dma.done %s474, 128
        $region72: #{tpu_custom_call.1} parent=67 // pred_fallthru
          _
      $region68: #{tpu_custom_call.1} parent=5 // pred_fallthru
        _
    $region6: #{tpu_custom_call.1} parent=1 // loop_footer
      %s22 = sadd.s32 1, %s18
    $region7: #{tpu_custom_call.1} parent=1 // loop_footer_branch
      %17 = sbr.rel target = $region3
    $region8: #{tpu_custom_call.1} parent=1 // loop_exit
      _
    %479 = vsyncpa [#allocation3], 1
    %s480 = scalar_lea.sflag [#allocation3], 1
    %481 = vsyncpa %s480, 1
    %482 = vsyncpa [#allocation8], 1
    %483 = vsyncpa [#allocation4], 1
    %s484 = scalar_lea.sflag [#allocation4], 1
    %485 = vsyncpa %s484, 1
    %486 = vsyncpa [#allocation5], 1
    %s487 = scalar_lea.sflag [#allocation5], 1
    %488 = vsyncpa %s487, 1

</llo_original>
